<compile_context>
chip_gen: v6e
topology: v6e:2x2x1
jax: 0.10.0
libtpu: 0.0.40
codegen_flags: <defaults>
</compile_context>

<pallas_src>
import functools

import jax
import jax.numpy as jnp
from jax.experimental import pallas as pl
from jax.experimental.pallas import tpu as pltpu

LANE = 128  # TPU vreg lane width


def _round_up(x, m):
    return ((x + m - 1) // m) * m


def _make_mlp_kernel(n_layers):
    """Kernel refs: x [TILE_B, Dpad] f32, w [L, Dpad, Dpad] bf16,
    b [L, 1, Dpad] f32, out [TILE_B, Dpad]."""

    def kernel(x_ref, w_ref, b_ref, o_ref):
        h = x_ref[...].astype(jnp.float32)
        for i in range(n_layers):                       # static unroll (L is small)
            w = w_ref[i]                                # [Dpad, Dpad] bf16
            b = b_ref[i]                                # [1, Dpad]    f32
            h = jnp.dot(h.astype(w.dtype), w,
                        preferred_element_type=jnp.float32) + b
            if i < n_layers - 1:
                h = jnp.maximum(h, 0.0)                 # torch.relu
        o_ref[...] = h.astype(o_ref.dtype)

    return kernel


@functools.partial(jax.jit, static_argnames=("tile_b",))
def qnetwork_forward(x, params, *, tile_b=256):
    """Forward pass of QNetwork.

    x:      [batch, state_size] float32
    params: list of (W, b) with W: [in, out] f32, b: [out] f32
    returns [batch, action_size] float32
    """
    n_layers = len(params)
    batch, state_size = x.shape
    action_size = params[-1][0].shape[1]

    # Lane-dense common feature width (all layers padded to the same Dpad so
    # the weights pack into one contiguous slab).
    dims = [state_size] + [w.shape[1] for w, _ in params]
    d_pad = max(_round_up(d, LANE) for d in dims)

    # Batch tiling: up to 256 rows per MXU pass, padded to a whole number of tiles.
    tb = min(tile_b, _round_up(batch, 8))
    b_pad = _round_up(batch, tb)

    # Pack weights (bf16) and biases (f32) into single zero-padded slabs.
    w_packed = jnp.zeros((n_layers, d_pad, d_pad), jnp.bfloat16)
    b_packed = jnp.zeros((n_layers, 1, d_pad), jnp.float32)
    for i, (w, b) in enumerate(params):
        w_packed = w_packed.at[i, : w.shape[0], : w.shape[1]].set(
            w.astype(jnp.bfloat16))
        bv = b.reshape(-1).astype(jnp.float32)
        b_packed = b_packed.at[i, 0, : bv.shape[0]].set(bv)

    # Zero-padded, lane-dense input slab.
    x_pad = jnp.zeros((b_pad, d_pad), x.dtype).at[:batch, :state_size].set(x)

    flops = 2 * b_pad * n_layers * d_pad * d_pad
    bytes_accessed = (x_pad.size * 4          # input activations (f32)
                      + w_packed.size * 2     # bf16 weights
                      + b_packed.size * 4     # f32 biases
                      + b_pad * d_pad * 4)    # f32 output

    kernel = _make_mlp_kernel(n_layers)

    out_padded = pl.pallas_call(
        kernel,
        out_shape=jax.ShapeDtypeStruct((b_pad, d_pad), x.dtype),
        grid=(b_pad // tb,),
        in_specs=[
            pl.BlockSpec((tb, d_pad), lambda i: (i, 0)),
            pl.BlockSpec((n_layers, d_pad, d_pad), lambda i: (0, 0, 0)),
            pl.BlockSpec((n_layers, 1, d_pad), lambda i: (0, 0, 0)),
        ],
        out_specs=pl.BlockSpec((tb, d_pad), lambda i: (i, 0)),
        compiler_params=pltpu.CompilerParams(
            dimension_semantics=("parallel",)),
        cost_estimate=pl.CostEstimate(
            flops=flops, transcendentals=0, bytes_accessed=bytes_accessed),
    )(x_pad, w_packed, b_packed)

    # Slice back to the real batch and real action columns.
    return out_padded[:batch, :action_size]


def init_qnetwork_params(key, state_size, action_size, hidden_sizes):
    """PyTorch nn.Linear default init: W, b ~ U(-1/sqrt(fan_in), 1/sqrt(fan_in)).
    Weights stored transposed as [in, out]; biases as [out]."""
    sizes = [state_size] + list(hidden_sizes) + [action_size]
    params = []
    for i in range(len(sizes) - 1):
        fan_in, fan_out = sizes[i], sizes[i + 1]
        key, kw, kb = jax.random.split(key, 3)
        bound = 1.0 / float(fan_in) ** 0.5
        w = jax.random.uniform(kw, (fan_in, fan_out), jnp.float32, -bound, bound)
        b = jax.random.uniform(kb, (fan_out,), jnp.float32, -bound, bound)
        params.append((w, b))
    return params


def reference_forward_f32(x, params):
    """Pure-f32 JAX reference (semantic check)."""
    h = x
    for i, (w, b) in enumerate(params):
        h = h @ w + b.reshape(1, -1)
        if i < len(params) - 1:
            h = jnp.maximum(h, 0.0)
    return h


def reference_forward_bf16(x, params):
    """Reference matching the kernel's numerics (bf16 matmul inputs, f32 accum)."""
    h = x.astype(jnp.float32)
    for i, (w, b) in enumerate(params):
        h = jnp.dot(h.astype(jnp.bfloat16), w.astype(jnp.bfloat16),
                    preferred_element_type=jnp.float32) + b.reshape(1, -1)
        if i < len(params) - 1:
            h = jnp.maximum(h, 0.0)
    return h


if __name__ == "__main__":
    # Small shapes consistent with the module: an MLP over flat state vectors.
    batch = 8
    state_size = 32
    hidden_sizes = (64, 64)
    action_size = 8

    key = jax.random.PRNGKey(0)
    key, kx = jax.random.split(key)
    x = jax.random.normal(kx, (batch, state_size), jnp.float32)

    params = init_qnetwork_params(key, state_size, action_size, hidden_sizes)

    out = qnetwork_forward(x, params)
    out = jax.block_until_ready(out)
    assert out.shape == (batch, action_size), out.shape

    # Tight check against a numerics-matched (bf16-weight) reference.
    ref_bf16 = reference_forward_bf16(x, params)
    assert jnp.allclose(out, ref_bf16, atol=1e-3, rtol=1e-3), \
        "kernel mismatch vs bf16-matched reference"

    # Loose semantic check against the full-f32 PyTorch-equivalent forward.
    ref_f32 = reference_forward_f32(x, params)
    assert jnp.allclose(out, ref_f32, atol=5e-2, rtol=5e-2), \
        "kernel diverged from f32 reference beyond bf16 tolerance"

    print("KERNEL_OK")
</pallas_src>

<mosaic_0001>
module attributes {stable_mosaic.version = 11 : i64} {
  func.func @kernel(%arg0: i32, %arg1: memref<8x128xf32, #tpu.memory_space<vmem>>, %arg2: memref<3x128x128xbf16, #tpu.memory_space<vmem>>, %arg3: memref<3x1x128xf32, #tpu.memory_space<vmem>>, %arg4: memref<8x128xf32, #tpu.memory_space<vmem>>) attributes {dimension_semantics = [#tpu.dimension_semantics<parallel>], iteration_bounds = array<i64: 1>, scalar_prefetch = 0 : i64, scratch_operands = 0 : i64, tpu.core_type = #tpu.core_type<tc>, window_params = [{transform_indices = @transform_0, window_bounds = array<i64: 8, 128>}, {pipeline_mode = #tpu.pipeline_mode<synchronous>, transform_indices = @transform_1, window_bounds = array<i64: 3, 128, 128>}, {pipeline_mode = #tpu.pipeline_mode<synchronous>, transform_indices = @transform_2, window_bounds = array<i64: 3, 1, 128>}, {transform_indices = @transform_3, window_bounds = array<i64: 8, 128>}]} {
    %c0 = arith.constant 0 : index
    %c0_0 = arith.constant 0 : index
    %0 = vector.load %arg1[%c0, %c0_0] : memref<8x128xf32, #tpu.memory_space<vmem>>, vector<8x128xf32>
    %c0_1 = arith.constant 0 : index
    %c0_2 = arith.constant 0 : index
    %c0_3 = arith.constant 0 : index
    %1 = vector.load %arg2[%c0_1, %c0_2, %c0_3] : memref<3x128x128xbf16, #tpu.memory_space<vmem>>, vector<1x128x128xbf16>
    %2 = vector.shape_cast %1 : vector<1x128x128xbf16> to vector<128x128xbf16>
    %c0_4 = arith.constant 0 : index
    %c0_5 = arith.constant 0 : index
    %c0_6 = arith.constant 0 : index
    %3 = vector.load %arg3[%c0_4, %c0_5, %c0_6] : memref<3x1x128xf32, #tpu.memory_space<vmem>>, vector<1x1x128xf32>
    %4 = vector.shape_cast %3 : vector<1x1x128xf32> to vector<1x128xf32>
    %5 = arith.truncf %0 : vector<8x128xf32> to vector<8x128xbf16>
    %cst = arith.constant dense<0.000000e+00> : vector<8x128xf32>
    %6 = tpu.matmul %5, %2, %cst {dimension_numbers = #tpu.dot_dimension_numbers<[1], [0], [0], [1], [0, 0, 1, 1], [], []>} : vector<8x128xbf16>, vector<128x128xbf16>, vector<8x128xf32> -> vector<8x128xf32>
    %7 = vector.broadcast %4 : vector<1x128xf32> to vector<8x128xf32>
    %8 = arith.addf %6, %7 : vector<8x128xf32>
    %cst_7 = arith.constant 0.000000e+00 : f32
    %9 = vector.broadcast %cst_7 : f32 to vector<8x128xf32>
    %10 = arith.maximumf %8, %9 : vector<8x128xf32>
    %c1 = arith.constant 1 : index
    %c0_8 = arith.constant 0 : index
    %c0_9 = arith.constant 0 : index
    %11 = vector.load %arg2[%c1, %c0_8, %c0_9] : memref<3x128x128xbf16, #tpu.memory_space<vmem>>, vector<1x128x128xbf16>
    %12 = vector.shape_cast %11 : vector<1x128x128xbf16> to vector<128x128xbf16>
    %c1_10 = arith.constant 1 : index
    %c0_11 = arith.constant 0 : index
    %c0_12 = arith.constant 0 : index
    %13 = vector.load %arg3[%c1_10, %c0_11, %c0_12] : memref<3x1x128xf32, #tpu.memory_space<vmem>>, vector<1x1x128xf32>
    %14 = vector.shape_cast %13 : vector<1x1x128xf32> to vector<1x128xf32>
    %15 = arith.truncf %10 : vector<8x128xf32> to vector<8x128xbf16>
    %cst_13 = arith.constant dense<0.000000e+00> : vector<8x128xf32>
    %16 = tpu.matmul %15, %12, %cst_13 {dimension_numbers = #tpu.dot_dimension_numbers<[1], [0], [0], [1], [0, 0, 1, 1], [], []>} : vector<8x128xbf16>, vector<128x128xbf16>, vector<8x128xf32> -> vector<8x128xf32>
    %17 = vector.broadcast %14 : vector<1x128xf32> to vector<8x128xf32>
    %18 = arith.addf %16, %17 : vector<8x128xf32>
    %cst_14 = arith.constant 0.000000e+00 : f32
    %19 = vector.broadcast %cst_14 : f32 to vector<8x128xf32>
    %20 = arith.maximumf %18, %19 : vector<8x128xf32>
    %c2 = arith.constant 2 : index
    %c0_15 = arith.constant 0 : index
    %c0_16 = arith.constant 0 : index
    %21 = vector.load %arg2[%c2, %c0_15, %c0_16] : memref<3x128x128xbf16, #tpu.memory_space<vmem>>, vector<1x128x128xbf16>
    %22 = vector.shape_cast %21 : vector<1x128x128xbf16> to vector<128x128xbf16>
    %c2_17 = arith.constant 2 : index
    %c0_18 = arith.constant 0 : index
    %c0_19 = arith.constant 0 : index
    %23 = vector.load %arg3[%c2_17, %c0_18, %c0_19] : memref<3x1x128xf32, #tpu.memory_space<vmem>>, vector<1x1x128xf32>
    %24 = vector.shape_cast %23 : vector<1x1x128xf32> to vector<1x128xf32>
    %25 = arith.truncf %20 : vector<8x128xf32> to vector<8x128xbf16>
    %cst_20 = arith.constant dense<0.000000e+00> : vector<8x128xf32>
    %26 = tpu.matmul %25, %22, %cst_20 {dimension_numbers = #tpu.dot_dimension_numbers<[1], [0], [0], [1], [0, 0, 1, 1], [], []>} : vector<8x128xbf16>, vector<128x128xbf16>, vector<8x128xf32> -> vector<8x128xf32>
    %27 = vector.broadcast %24 : vector<1x128xf32> to vector<8x128xf32>
    %28 = arith.addf %26, %27 : vector<8x128xf32>
    %c0_21 = arith.constant 0 : index
    %c0_22 = arith.constant 0 : index
    %29 = vector.load %arg4[%c0_21, %c0_22] : memref<8x128xf32, #tpu.memory_space<vmem>>, vector<8x128xf32>
    tpu.vector_store %arg4[%c0_21, %c0_22], %28 {strides = array<i32>} : memref<8x128xf32, #tpu.memory_space<vmem>>, vector<8x128xf32>,
    return
  }
  func.func @transform_0(%arg0: i32) -> (i32, i32) {
    %c0_i32 = arith.constant 0 : i32
    %c0_i32_0 = arith.constant 0 : i32
    return %arg0, %c0_i32 : i32, i32
  }
  func.func @transform_1(%arg0: i32) -> (i32, i32, i32) {
    %c0_i32 = arith.constant 0 : i32
    %c0_i32_0 = arith.constant 0 : i32
    %c0_i32_1 = arith.constant 0 : i32
    %c0_i32_2 = arith.constant 0 : i32
    return %c0_i32, %c0_i32_0, %c0_i32_1 : i32, i32, i32
  }
  func.func @transform_2(%arg0: i32) -> (i32, i32, i32) {
    %c0_i32 = arith.constant 0 : i32
    %c0_i32_0 = arith.constant 0 : i32
    %c0_i32_1 = arith.constant 0 : i32
    %c0_i32_2 = arith.constant 0 : i32
    return %c0_i32, %c0_i32_0, %c0_i32_1 : i32, i32, i32
  }
  func.func @transform_3(%arg0: i32) -> (i32, i32) {
    %c0_i32 = arith.constant 0 : i32
    %c0_i32_0 = arith.constant 0 : i32
    return %arg0, %c0_i32 : i32, i32
  }
}

</mosaic_0001>

<llo_original>
// kernel: qnetwork_forward.1
$region0: #{qnetwork_forward.1}
  #allocation0 [shape = 'u32[]', space=smem, size = 0x4, offset = 0x4, fixed_abs, tag = 'smem constant byte address 0x4 - core index']
  #allocation1 [shape = 'u32[144,128]{1,0:T(1,128)}', space=vmem, size = 0x12000, scoped, tag = 'internal scratch']
  %s0 = inlined_call_operand.vmem [shape: f32[8,128], index: 0, kind: input, shape index: {}]
  %s1 = inlined_call_operand.vmem [shape: bf16[3,128,128], index: 1, kind: input, shape index: {}]
  %s2 = inlined_call_operand.vmem [shape: f32[3,1,128], index: 2, kind: input, shape index: {}]
  %s3 = inlined_call_operand.hbm [shape: f32[8,128], index: 3, kind: output, shape index: {}]
  %s4 = sld [smem:[#allocation0]]
  $region22: #{qnetwork_forward.1} parent=0
    _
  %s6 = ssub.s32 1, %s4
  %s7 = scalar_select 0, %s6, %s4
  $region1: #{qnetwork_forward.1} parent=0
    #allocation2 [shape = 'u8[4096]{0}', space=vmem, size = 0x1000, scoped, tag = 'output window, operand 0, single buffered']
    #allocation3 [shape = 's32[1]{0}', space=sflag, size = 0x4, scoped, tag = 'scoped memory for qnetwork_forward.1']
    %8 = vsyncpa [#allocation3], 0
    // Predicated region
    $region2: #{qnetwork_forward.1} parent=1 // pred_check
      _
    $region3: #{qnetwork_forward.1} parent=1 // pred_check_branch
      %10 = sbr.rel (0) target = $region5
    $region4: #{qnetwork_forward.1} parent=1 // pred_region
      _
    $region5: #{qnetwork_forward.1} parent=1 // pred_fallthru
      _
    // Predicated region
    $region6: #{qnetwork_forward.1} parent=1 // pred_check
      _
    $region7: #{qnetwork_forward.1} parent=1 // pred_check_branch
      %12 = sbr.rel (0) target = $region9
    $region8: #{qnetwork_forward.1} parent=1 // pred_region
      _
    $region9: #{qnetwork_forward.1} parent=1 // pred_fallthru
      _
    // Predicated region
    $region10: #{qnetwork_forward.1} parent=1 // pred_check
      _
    $region11: #{qnetwork_forward.1} parent=1 // pred_check_branch
      %14 = sbr.rel (0) target = $region13
    $region12: #{qnetwork_forward.1} parent=1 // pred_region
      _
    $region13: #{qnetwork_forward.1} parent=1 // pred_fallthru
      _
    %v16 = vld [vmem:[%s0] sm:$0xff]
    %v17 = vld [vmem:[%s1] sm:$0xf]
    %v18 = vld [vmem:[%s1 + $0x4] sm:$0xf]
    %v19 = vld [vmem:[%s1 + $0x8] sm:$0xf]
    %v20 = vld [vmem:[%s1 + $0xc] sm:$0xf]
    %v21 = vld [vmem:[%s1 + $0x10] sm:$0xf]
    %v22 = vld [vmem:[%s1 + $0x14] sm:$0xf]
    %v23 = vld [vmem:[%s1 + $0x18] sm:$0xf]
    %v24 = vld [vmem:[%s1 + $0x1c] sm:$0xf]
    %v25 = vld [vmem:[%s1 + $0x20] sm:$0xf]
    %v26 = vld [vmem:[%s1 + $0x24] sm:$0xf]
    %v27 = vld [vmem:[%s1 + $0x28] sm:$0xf]
    %v28 = vld [vmem:[%s1 + $0x2c] sm:$0xf]
    %v29 = vld [vmem:[%s1 + $0x30] sm:$0xf]
    %v30 = vld [vmem:[%s1 + $0x34] sm:$0xf]
    %v31 = vld [vmem:[%s1 + $0x38] sm:$0xf]
    %v32 = vld [vmem:[%s1 + $0x3c] sm:$0xf]
    %v33 = vld [vmem:[%s2] sm:$0x1]
    %v34 = vpack.c.bf16 %v16, %v16
    %v36 = vlaneseq
    %v37 = vshrl.u32 %v36, 7
    %v38 = vsub.s32 0, %v37
    %v39 = vrot.slane %v33, %v38
    %v57 = vunpack.c.l.b16 %v17
    %v58 = vunpack.c.l.b16 %v18
    %v59 = vunpack.c.l.b16 %v19
    %v60 = vunpack.c.l.b16 %v20
    %v61 = vunpack.c.l.b16 %v21
    %v62 = vunpack.c.l.b16 %v22
    %v63 = vunpack.c.l.b16 %v23
    %v64 = vunpack.c.l.b16 %v24
    %v65 = vunpack.c.l.b16 %v25
    %v66 = vunpack.c.l.b16 %v26
    %v67 = vunpack.c.l.b16 %v27
    %v68 = vunpack.c.l.b16 %v28
    %v69 = vunpack.c.l.b16 %v29
    %v70 = vunpack.c.l.b16 %v30
    %v71 = vunpack.c.l.b16 %v31
    %v72 = vunpack.c.l.b16 %v32
    %v73 = vpack.c.b16 %v58, %v57
    %v74 = vpack.c.b16 %v60, %v59
    %v75 = vpack.c.b16 %v62, %v61
    %v76 = vpack.c.b16 %v64, %v63
    %v77 = vpack.c.b16 %v66, %v65
    %v78 = vpack.c.b16 %v68, %v67
    %v79 = vpack.c.b16 %v70, %v69
    %v80 = vpack.c.b16 %v72, %v71
    %89 = vmatprep.subr.bf16.mxu0 0
    %90 = vmatpush1.bf16.msra.mxu0 %v80
    %91 = vmatprep.subr.bf16.mxu0 0
    %92 = vmatpush1.bf16.msra.mxu0 %v79
    %93 = vmatprep.subr.bf16.mxu0 0
    %94 = vmatpush1.bf16.msra.mxu0 %v78
    %95 = vmatprep.subr.bf16.mxu0 0
    %96 = vmatpush1.bf16.msra.mxu0 %v77
    %97 = vmatprep.subr.bf16.mxu0 0
    %98 = vmatpush1.bf16.msra.mxu0 %v76
    %99 = vmatprep.subr.bf16.mxu0 0
    %100 = vmatpush1.bf16.msra.mxu0 %v75
    %101 = vmatprep.subr.bf16.mxu0 0
    %102 = vmatpush1.bf16.msra.mxu0 %v74
    %103 = vmatprep.subr.bf16.mxu0 0
    %104 = vmatpush1.bf16.msra.mxu0 %v73
    %105 = vmatprep.subr.bf16.mxu0 0
    %106 = vmatpush2.bf16.msra.mxu0 0
    %107 = vmatprep.subr.bf16.mxu0 0
    %108 = vmatpush2.bf16.msra.mxu0 0
    %109 = vmatprep.subr.bf16.mxu0 0
    %110 = vmatpush2.bf16.msra.mxu0 0
    %111 = vmatprep.subr.bf16.mxu0 0
    %112 = vmatpush2.bf16.msra.mxu0 0
    %113 = vmatprep.subr.bf16.mxu0 0
    %114 = vmatpush2.bf16.msra.mxu0 0
    %115 = vmatprep.subr.bf16.mxu0 0
    %116 = vmatpush2.bf16.msra.mxu0 0
    %117 = vmatprep.subr.bf16.mxu0 0
    %118 = vmatpush2.bf16.msra.mxu0 0
    %119 = vmatprep.subr.bf16.mxu0 0
    %120 = vmatpush2.bf16.msra.mxu0 0
    %121 = vmatprep.mubr.bf16.mxu0 0
    %122 = vmatmul.mubr.bf16.gmra.mxu0 %v34
    %v123 = vpop.f32.mrf.mxu0
    %v124 = vadd.f32 %v39, %v123
    %v125 = vpop.f32.mrf.mxu0
    %v126 = vpop.f32.mrf.mxu0
    %v127 = vpop.f32.mrf.mxu0
    %128 = vdwg.mxu0
    %v129 = vmax.f32 %v124, 0.0
    %s130 = scalar_lea.vmem %s1, 64
    %v131 = vld [vmem:[%s130] sm:$0xf]
    %v132 = vld [vmem:[%s130 + $0x4] sm:$0xf]
    %v133 = vld [vmem:[%s130 + $0x8] sm:$0xf]
    %v134 = vld [vmem:[%s130 + $0xc] sm:$0xf]
    %v135 = vld [vmem:[%s130 + $0x10] sm:$0xf]
    %v136 = vld [vmem:[%s130 + $0x14] sm:$0xf]
    %v137 = vld [vmem:[%s130 + $0x18] sm:$0xf]
    %v138 = vld [vmem:[%s130 + $0x1c] sm:$0xf]
    %v139 = vld [vmem:[%s130 + $0x20] sm:$0xf]
    %v140 = vld [vmem:[%s130 + $0x24] sm:$0xf]
    %v141 = vld [vmem:[%s130 + $0x28] sm:$0xf]
    %v142 = vld [vmem:[%s130 + $0x2c] sm:$0xf]
    %v143 = vld [vmem:[%s130 + $0x30] sm:$0xf]
    %v144 = vld [vmem:[%s130 + $0x34] sm:$0xf]
    %v145 = vld [vmem:[%s130 + $0x38] sm:$0xf]
    %v146 = vld [vmem:[%s130 + $0x3c] sm:$0xf]
    %s147 = scalar_lea.vmem %s2, 1
    %v148 = vld [vmem:[%s147] sm:$0x1]
    %v149 = vpack.c.bf16 %v129, %v129
    %v151 = vlaneseq
    %v152 = vshrl.u32 %v151, 7
    %v153 = vsub.s32 0, %v152
    %v154 = vrot.slane %v148, %v153
    %v172 = vunpack.c.l.b16 %v131
    %v173 = vunpack.c.l.b16 %v132
    %v174 = vunpack.c.l.b16 %v133
    %v175 = vunpack.c.l.b16 %v134
    %v176 = vunpack.c.l.b16 %v135
    %v177 = vunpack.c.l.b16 %v136
    %v178 = vunpack.c.l.b16 %v137
    %v179 = vunpack.c.l.b16 %v138
    %v180 = vunpack.c.l.b16 %v139
    %v181 = vunpack.c.l.b16 %v140
    %v182 = vunpack.c.l.b16 %v141
    %v183 = vunpack.c.l.b16 %v142
    %v184 = vunpack.c.l.b16 %v143
    %v185 = vunpack.c.l.b16 %v144
    %v186 = vunpack.c.l.b16 %v145
    %v187 = vunpack.c.l.b16 %v146
    %v188 = vpack.c.b16 %v173, %v172
    %v189 = vpack.c.b16 %v175, %v174
    %v190 = vpack.c.b16 %v177, %v176
    %v191 = vpack.c.b16 %v179, %v178
    %v192 = vpack.c.b16 %v181, %v180
    %v193 = vpack.c.b16 %v183, %v182
    %v194 = vpack.c.b16 %v185, %v184
    %v195 = vpack.c.b16 %v187, %v186
    %204 = vmatprep.subr.bf16.mxu0 0
    %205 = vmatpush1.bf16.msra.mxu0 %v195
    %206 = vmatprep.subr.bf16.mxu0 0
    %207 = vmatpush1.bf16.msra.mxu0 %v194
    %208 = vmatprep.subr.bf16.mxu0 0
    %209 = vmatpush1.bf16.msra.mxu0 %v193
    %210 = vmatprep.subr.bf16.mxu0 0
    %211 = vmatpush1.bf16.msra.mxu0 %v192
    %212 = vmatprep.subr.bf16.mxu0 0
    %213 = vmatpush1.bf16.msra.mxu0 %v191
    %214 = vmatprep.subr.bf16.mxu0 0
    %215 = vmatpush1.bf16.msra.mxu0 %v190
    %216 = vmatprep.subr.bf16.mxu0 0
    %217 = vmatpush1.bf16.msra.mxu0 %v189
    %218 = vmatprep.subr.bf16.mxu0 0
    %219 = vmatpush1.bf16.msra.mxu0 %v188
    %220 = vmatprep.subr.bf16.mxu0 0
    %221 = vmatpush2.bf16.msra.mxu0 0
    %222 = vmatprep.subr.bf16.mxu0 0
    %223 = vmatpush2.bf16.msra.mxu0 0
    %224 = vmatprep.subr.bf16.mxu0 0
    %225 = vmatpush2.bf16.msra.mxu0 0
    %226 = vmatprep.subr.bf16.mxu0 0
    %227 = vmatpush2.bf16.msra.mxu0 0
    %228 = vmatprep.subr.bf16.mxu0 0
    %229 = vmatpush2.bf16.msra.mxu0 0
    %230 = vmatprep.subr.bf16.mxu0 0
    %231 = vmatpush2.bf16.msra.mxu0 0
    %232 = vmatprep.subr.bf16.mxu0 0
    %233 = vmatpush2.bf16.msra.mxu0 0
    %234 = vmatprep.subr.bf16.mxu0 0
    %235 = vmatpush2.bf16.msra.mxu0 0
    %236 = vmatprep.mubr.bf16.mxu0 0
    %237 = vmatmul.mubr.bf16.gmra.mxu0 %v149
    %v238 = vpop.f32.mrf.mxu0
    %v239 = vadd.f32 %v154, %v238
    %v240 = vpop.f32.mrf.mxu0
    %v241 = vpop.f32.mrf.mxu0
    %v242 = vpop.f32.mrf.mxu0
    %243 = vdwg.mxu0
    %v244 = vmax.f32 %v239, 0.0
    %s245 = scalar_lea.vmem %s1, 128
    %v246 = vld [vmem:[%s245] sm:$0xf]
    %v247 = vld [vmem:[%s245 + $0x4] sm:$0xf]
    %v248 = vld [vmem:[%s245 + $0x8] sm:$0xf]
    %v249 = vld [vmem:[%s245 + $0xc] sm:$0xf]
    %v250 = vld [vmem:[%s245 + $0x10] sm:$0xf]
    %v251 = vld [vmem:[%s245 + $0x14] sm:$0xf]
    %v252 = vld [vmem:[%s245 + $0x18] sm:$0xf]
    %v253 = vld [vmem:[%s245 + $0x1c] sm:$0xf]
    %v254 = vld [vmem:[%s245 + $0x20] sm:$0xf]
    %v255 = vld [vmem:[%s245 + $0x24] sm:$0xf]
    %v256 = vld [vmem:[%s245 + $0x28] sm:$0xf]
    %v257 = vld [vmem:[%s245 + $0x2c] sm:$0xf]
    %v258 = vld [vmem:[%s245 + $0x30] sm:$0xf]
    %v259 = vld [vmem:[%s245 + $0x34] sm:$0xf]
    %v260 = vld [vmem:[%s245 + $0x38] sm:$0xf]
    %v261 = vld [vmem:[%s245 + $0x3c] sm:$0xf]
    %s262 = scalar_lea.vmem %s2, 2
    %v263 = vld [vmem:[%s262] sm:$0x1]
    %v264 = vpack.c.bf16 %v244, %v244
    %v266 = vlaneseq
    %v267 = vshrl.u32 %v266, 7
    %v268 = vsub.s32 0, %v267
    %v269 = vrot.slane %v263, %v268
    %v287 = vunpack.c.l.b16 %v246
    %v288 = vunpack.c.l.b16 %v247
    %v289 = vunpack.c.l.b16 %v248
    %v290 = vunpack.c.l.b16 %v249
    %v291 = vunpack.c.l.b16 %v250
    %v292 = vunpack.c.l.b16 %v251
    %v293 = vunpack.c.l.b16 %v252
    %v294 = vunpack.c.l.b16 %v253
    %v295 = vunpack.c.l.b16 %v254
    %v296 = vunpack.c.l.b16 %v255
    %v297 = vunpack.c.l.b16 %v256
    %v298 = vunpack.c.l.b16 %v257
    %v299 = vunpack.c.l.b16 %v258
    %v300 = vunpack.c.l.b16 %v259
    %v301 = vunpack.c.l.b16 %v260
    %v302 = vunpack.c.l.b16 %v261
    %v303 = vpack.c.b16 %v288, %v287
    %v304 = vpack.c.b16 %v290, %v289
    %v305 = vpack.c.b16 %v292, %v291
    %v306 = vpack.c.b16 %v294, %v293
    %v307 = vpack.c.b16 %v296, %v295
    %v308 = vpack.c.b16 %v298, %v297
    %v309 = vpack.c.b16 %v300, %v299
    %v310 = vpack.c.b16 %v302, %v301
    %319 = vmatprep.subr.bf16.mxu0 0
    %320 = vmatpush1.bf16.msra.mxu0 %v310
    %321 = vmatprep.subr.bf16.mxu0 0
    %322 = vmatpush1.bf16.msra.mxu0 %v309
    %323 = vmatprep.subr.bf16.mxu0 0
    %324 = vmatpush1.bf16.msra.mxu0 %v308
    %325 = vmatprep.subr.bf16.mxu0 0
    %326 = vmatpush1.bf16.msra.mxu0 %v307
    %327 = vmatprep.subr.bf16.mxu0 0
    %328 = vmatpush1.bf16.msra.mxu0 %v306
    %329 = vmatprep.subr.bf16.mxu0 0
    %330 = vmatpush1.bf16.msra.mxu0 %v305
    %331 = vmatprep.subr.bf16.mxu0 0
    %332 = vmatpush1.bf16.msra.mxu0 %v304
    %333 = vmatprep.subr.bf16.mxu0 0
    %334 = vmatpush1.bf16.msra.mxu0 %v303
    %335 = vmatprep.subr.bf16.mxu0 0
    %336 = vmatpush2.bf16.msra.mxu0 0
    %337 = vmatprep.subr.bf16.mxu0 0
    %338 = vmatpush2.bf16.msra.mxu0 0
    %339 = vmatprep.subr.bf16.mxu0 0
    %340 = vmatpush2.bf16.msra.mxu0 0
    %341 = vmatprep.subr.bf16.mxu0 0
    %342 = vmatpush2.bf16.msra.mxu0 0
    %343 = vmatprep.subr.bf16.mxu0 0
    %344 = vmatpush2.bf16.msra.mxu0 0
    %345 = vmatprep.subr.bf16.mxu0 0
    %346 = vmatpush2.bf16.msra.mxu0 0
    %347 = vmatprep.subr.bf16.mxu0 0
    %348 = vmatpush2.bf16.msra.mxu0 0
    %349 = vmatprep.subr.bf16.mxu0 0
    %350 = vmatpush2.bf16.msra.mxu0 0
    %351 = vmatprep.mubr.bf16.mxu0 0
    %352 = vmatmul.mubr.bf16.gmra.mxu0 %v264
    %v353 = vpop.f32.mrf.mxu0
    %v354 = vadd.f32 %v269, %v353
    %v355 = vpop.f32.mrf.mxu0
    %v356 = vpop.f32.mrf.mxu0
    %v357 = vpop.f32.mrf.mxu0
    %358 = vdwg.mxu0
    %359 = vst [vmem:[#allocation2] sm:$0xff] %v354
    // Predicated region
    $region14: #{qnetwork_forward.1} parent=1 // pred_check
      _
    $region15: #{qnetwork_forward.1} parent=1 // pred_check_branch
      %361 = sbr.rel (0) target = $region17
    $region16: #{qnetwork_forward.1} parent=1 // pred_region
      %s363 = ssub.s32 128, 128
      %364 = vsyncadd [#allocation3], %s363
      %s366 = sshll.u32 [#allocation2], 4
      %s367 = int_to_ptr.vmem [resolvable:$true] %s366
      %369 = dma.vmem_to_hbm [thread:$0]  %s367, 128, %s3, [#allocation3]
    $region17: #{qnetwork_forward.1} parent=1 // pred_fallthru
      _
    // Predicated region
    $region18: #{qnetwork_forward.1} parent=1 // pred_check
      _
    $region19: #{qnetwork_forward.1} parent=1 // pred_check_branch
      %371 = sbr.rel (0) target = $region21
    $region20: #{qnetwork_forward.1} parent=1 // pred_region
      %372 = dma.done [#allocation3], 128
    $region21: #{qnetwork_forward.1} parent=1 // pred_fallthru
      _
    %373 = vsyncpa [#allocation3], 1

</llo_original>
